<compile_context>
chip_gen: v5e
topology: v5e:2x2
jax: 0.10.0
libtpu: 0.0.40
codegen_flags: <defaults>
</compile_context>

<pallas_src>
import functools
import math

import jax
import jax.numpy as jnp
from jax.experimental import pallas as pl
from jax.experimental.pallas import tpu as pltpu


def _round_up(x, m):
    return ((x + m - 1) // m) * m


def _pick_l_tile(l_out, tl_max):
    """Largest multiple-of-128 divisor of l_out that is <= tl_max."""
    tl = max(128, min(l_out, (tl_max // 128) * 128))
    while l_out % tl:
        tl -= 128
    return tl


# ----------------------------------------------------------------------------
# Pallas kernel: fused Conv1d (tap-stacked single GEMM) + BN shift + activation
# ----------------------------------------------------------------------------
def _conv_bn_act_kernel(x_ref, w_ref, shift_ref, o_ref, *, K, TL, activation):
    """
    x_ref:     (1, Cin_p, Lin_p)   zero-padded input row (l-invariant block)
    w_ref:     (Cout_p, K*Cin_p)   BN-scale-folded, tap-stacked weights
    shift_ref: (Cout_p, 1)         folded BN shift (f32)
    o_ref:     (1, Cout_p, TL)     lane-dense output tile (TL % 128 == 0)
    """
    l = pl.program_id(1)
    start = pl.multiple_of(l * TL, 128)

    # Load the TL + (K-1) halo window once, then build the tap-stacked
    # activation tile with K static lane shifts (one pass); feeds one big GEMM.
    x_win = x_ref[0, :, pl.ds(start, TL + K - 1)]            # (Cin_p, TL+K-1)
    x_stk = jnp.concatenate([x_win[:, k:k + TL] for k in range(K)], axis=0)

    acc = jnp.dot(w_ref[...], x_stk, preferred_element_type=jnp.float32)
    o_ref[0] = activation(acc + shift_ref[...]).astype(o_ref.dtype)


# ----------------------------------------------------------------------------
# jit-compiled forward (pad -> pallas_call -> crop)
# ----------------------------------------------------------------------------
def _conv_block_forward(x, w_stk, shift, *, out_channels, K, pad_left,
                        cin_p, cout_p, activation, compute_dtype, out_dtype,
                        tl_max):
    B, Cin, L = x.shape
    L_out = _round_up(L, 128)                   # lane-dense output width
    TL = _pick_l_tile(L_out, tl_max)            # lane-tile size
    NL = L_out // TL
    Lin_p = _round_up(L_out + K - 1, 128)       # input width incl. conv halo

    # 'same' halo + channel/lane padding.  Under jit this is a single fused
    # XLA pad feeding the kernel (no eager extra HBM round trip).
    x_pad = jnp.zeros((B, cin_p, Lin_p), compute_dtype)
    x_pad = x_pad.at[:, :Cin, pad_left:pad_left + L].set(x.astype(compute_dtype))

    kernel = functools.partial(_conv_bn_act_kernel, K=K, TL=TL,
                               activation=activation)

    itemsize = jnp.dtype(compute_dtype).itemsize
    in_blk = cin_p * Lin_p * itemsize
    out_blk = cout_p * TL * jnp.dtype(out_dtype).itemsize
    w_bytes = cout_p * K * cin_p * itemsize + cout_p * 4
    # Explicit scoped-VMEM budget: double-buffered in/out blocks + resident
    # weights + slack.  TODO(synk): on v7x (64 MiB physical VMEM) keep this
    # <= ~48 MiB by shrinking tl_max / switching to halo-tiled input blocks.
    vmem_limit = int(min(max(2 * (in_blk + out_blk) + w_bytes + (4 << 20),
                             32 << 20), 100 << 20))

    out = pl.pallas_call(
        kernel,
        out_shape=jax.ShapeDtypeStruct((B, cout_p, L_out), out_dtype),
        grid_spec=pltpu.PrefetchScalarGridSpec(
            num_scalar_prefetch=0,
            grid=(B, NL),
            in_specs=[
                pl.BlockSpec((1, cin_p, Lin_p), lambda b, l: (b, 0, 0)),
                pl.BlockSpec((cout_p, K * cin_p), lambda b, l: (0, 0)),
                pl.BlockSpec((cout_p, 1), lambda b, l: (0, 0)),
            ],
            out_specs=pl.BlockSpec((1, cout_p, TL), lambda b, l: (b, 0, l)),
        ),
        compiler_params=pltpu.CompilerParams(
            dimension_semantics=("parallel", "parallel"),
            vmem_limit_bytes=vmem_limit),
    )(x_pad, w_stk, shift)

    # Strip channel / lane padding (pad region holds activation(shift) values).
    return out[:, :out_channels, :L]


# ----------------------------------------------------------------------------
# ConvBlock module (eval-mode forward semantics of the PyTorch reference).
# ----------------------------------------------------------------------------
class ConvBlockPallas:
    """Conv1d(bias=False, stride=1, 'same') -> BatchNorm1d -> activation.

    TODO(synk): BatchNorm1d training mode (batch statistics) and nn.Dropout
                (train-only) are not implemented; inference semantics only.
    """

    def __init__(self, in_channels, out_channels, kernel_size, stride=1,
                 padding='same', activation=jax.nn.relu, dropout_rate=0.0,
                 *, key, eps=1e-5, compute_dtype=jnp.float32,
                 out_dtype=jnp.float32, tl_max=1024):
        assert stride == 1 and padding == 'same', \
            "PyTorch padding='same' requires stride=1 (only config supported)"
        self.in_channels = in_channels
        self.out_channels = out_channels
        self.kernel_size = kernel_size
        self.activation = activation
        self.eps = eps
        self.dropout_rate = dropout_rate        # eval-mode identity
        self.compute_dtype = compute_dtype
        self.out_dtype = out_dtype

        k1, k2, k3, k4, k5 = jax.random.split(key, 5)
        fan_in = in_channels * kernel_size
        bound = 1.0 / math.sqrt(fan_in)
        # PyTorch Conv1d weight layout: (out_channels, in_channels, kernel_size)
        self.weight = jax.random.uniform(
            k1, (out_channels, in_channels, kernel_size), jnp.float32, -bound, bound)
        # BatchNorm1d affine params + running stats (randomized so the folded
        # scale/shift path is actually exercised by the numerical check).
        self.gamma = jax.random.uniform(k2, (out_channels,), jnp.float32, 0.5, 1.5)
        self.beta = jax.random.uniform(k3, (out_channels,), jnp.float32, -0.5, 0.5)
        self.running_mean = 0.1 * jax.random.normal(k4, (out_channels,), jnp.float32)
        self.running_var = jax.random.uniform(k5, (out_channels,), jnp.float32, 0.5, 1.5)

        # ---- one-time kernel-side weight prep (fold BN, stack taps, pad) ----
        K = kernel_size
        itemsize = jnp.dtype(compute_dtype).itemsize
        sublane = (8 * 4) // itemsize           # 8 for f32, 16 for bf16
        self.cin_p = _round_up(in_channels, sublane)
        self.cout_p = _round_up(out_channels, sublane)

        scale = self.gamma / jnp.sqrt(self.running_var + self.eps)
        shift = self.beta - self.running_mean * scale
        w_scaled = self.weight * scale[:, None, None]          # (Cout, Cin, K)

        # Tap-stacked layout (Cout_p, K*Cin_p): tap k occupies columns
        # [k*Cin_p, k*Cin_p + Cin).  Feeds one MXU GEMM of contraction K*Cin_p.
        w_stk = jnp.zeros((self.cout_p, K * self.cin_p), jnp.float32)
        for k in range(K):
            w_stk = w_stk.at[:out_channels,
                             k * self.cin_p:k * self.cin_p + in_channels].set(
                w_scaled[:, :, k])
        self.w_stk = w_stk.astype(compute_dtype)
        self.shift_pad = jnp.zeros((self.cout_p, 1), jnp.float32
                                   ).at[:out_channels, 0].set(shift)

        pad_left = (K - 1) // 2                 # PyTorch 'same' padding split
        self._forward = jax.jit(functools.partial(
            _conv_block_forward,
            out_channels=out_channels, K=K, pad_left=pad_left,
            cin_p=self.cin_p, cout_p=self.cout_p, activation=activation,
            compute_dtype=compute_dtype, out_dtype=out_dtype, tl_max=tl_max))

    def __call__(self, x):
        assert x.shape[1] == self.in_channels
        # TODO(synk): for tiny per-row work (small Cin/Cout/L), pack several
        #             batch rows into one grid step to amortize the ~0.35us
        #             per-grid-step overhead.
        return self._forward(x, self.w_stk, self.shift_pad)

    # ----- pure-JAX reference (for correctness check only) -----
    def reference(self, x):
        K = self.kernel_size
        pad_left = (K - 1) // 2
        pad_right = (K - 1) - pad_left
        y = jax.lax.conv_general_dilated(
            x.astype(jnp.float32), self.weight,
            window_strides=(1,), padding=[(pad_left, pad_right)],
            dimension_numbers=('NCH', 'OIH', 'NCH'))
        scale = self.gamma / jnp.sqrt(self.running_var + self.eps)
        shift = self.beta - self.running_mean * scale
        y = y * scale[None, :, None] + shift[None, :, None]
        return self.activation(y)


if __name__ == "__main__":
    # Small shapes consistent with the module: batch=2, channels 4->8, L=16, K=5.
    B, C_IN, C_OUT, L, K = 2, 4, 8, 16, 5

    key = jax.random.PRNGKey(0)
    key, kx, kp = jax.random.split(key, 3)
    x = jax.random.normal(kx, (B, C_IN, L), jnp.float32)

    # f32 operands: exact eval-mode semantics, tight numerical check.
    block32 = ConvBlockPallas(C_IN, C_OUT, K, stride=1, padding='same',
                              activation=jax.nn.relu, dropout_rate=0.0,
                              key=kp, compute_dtype=jnp.float32)
    y = jax.block_until_ready(block32(x))
    assert y.shape == (B, C_OUT, L)
    y_ref = jax.block_until_ready(block32.reference(x))
    max_err = float(jnp.max(jnp.abs(y - y_ref)))
    assert jnp.allclose(y, y_ref, atol=1e-5, rtol=1e-5), f"f32 max_err={max_err}"

    # bf16 operands (v6e/v7x fast path): halves VMEM/HBM per tile, full-rate MXU.
    block16 = ConvBlockPallas(C_IN, C_OUT, K, stride=1, padding='same',
                              activation=jax.nn.relu, dropout_rate=0.0,
                              key=kp, compute_dtype=jnp.bfloat16)
    y16 = jax.block_until_ready(block16(x))
    assert y16.shape == (B, C_OUT, L)
    y16_ref = jax.block_until_ready(block16.reference(x))
    max_err16 = float(jnp.max(jnp.abs(y16.astype(jnp.float32) - y16_ref)))
    assert jnp.allclose(y16.astype(jnp.float32), y16_ref,
                        atol=5e-2, rtol=5e-2), f"bf16 max_err={max_err16}"

    print("KERNEL_OK")
</pallas_src>

<mosaic_0001>
module attributes {stable_mosaic.version = 11 : i64} {
  func.func @_conv_bn_act_kernel(%arg0: i32, %arg1: i32, %arg2: memref<1x8x256xf32, #tpu.memory_space<vmem>>, %arg3: memref<8x40xf32, #tpu.memory_space<vmem>>, %arg4: memref<8x1xf32, #tpu.memory_space<vmem>>, %arg5: memref<1x8x128xf32, #tpu.memory_space<vmem>>) attributes {dimension_semantics = [#tpu.dimension_semantics<parallel>, #tpu.dimension_semantics<parallel>], iteration_bounds = array<i64: 2, 1>, scalar_prefetch = 0 : i64, scratch_operands = 0 : i64, tpu.core_type = #tpu.core_type<tc>, window_params = [{transform_indices = @transform_0, window_bounds = array<i64: 1, 8, 256>}, {pipeline_mode = #tpu.pipeline_mode<synchronous>, transform_indices = @transform_1, window_bounds = array<i64: 8, 40>}, {pipeline_mode = #tpu.pipeline_mode<synchronous>, transform_indices = @transform_2, window_bounds = array<i64: 8, 1>}, {transform_indices = @transform_3, window_bounds = array<i64: 1, 8, 128>}]} {
    %c128_i32 = arith.constant 128 : i32
    %0 = arith.muli %arg1, %c128_i32 : i32
    %1 = tpu.assume_multiple %0, 128 : i32
    %c0 = arith.constant 0 : index
    %c0_0 = arith.constant 0 : index
    %2 = arith.index_cast %1 : i32 to index
    %3 = vector.load %arg2[%c0, %c0_0, %2] : memref<1x8x256xf32, #tpu.memory_space<vmem>>, vector<1x8x132xf32>
    %4 = vector.shape_cast %3 : vector<1x8x132xf32> to vector<8x132xf32>
    %5 = vector.extract_strided_slice %4 {offsets = [0, 0], sizes = [8, 128], strides = [1, 1]} : vector<8x132xf32> to vector<8x128xf32>
    %6 = vector.extract_strided_slice %4 {offsets = [0, 1], sizes = [8, 128], strides = [1, 1]} : vector<8x132xf32> to vector<8x128xf32>
    %7 = vector.extract_strided_slice %4 {offsets = [0, 2], sizes = [8, 128], strides = [1, 1]} : vector<8x132xf32> to vector<8x128xf32>
    %8 = vector.extract_strided_slice %4 {offsets = [0, 3], sizes = [8, 128], strides = [1, 1]} : vector<8x132xf32> to vector<8x128xf32>
    %9 = vector.extract_strided_slice %4 {offsets = [0, 4], sizes = [8, 128], strides = [1, 1]} : vector<8x132xf32> to vector<8x128xf32>
    %10 = tpu.concatenate %5, %6, %7, %8, %9 in 0 : vector<8x128xf32>, vector<8x128xf32>, vector<8x128xf32>, vector<8x128xf32>, vector<8x128xf32> -> vector<40x128xf32>
    %c0_1 = arith.constant 0 : index
    %c0_2 = arith.constant 0 : index
    %11 = vector.load %arg3[%c0_1, %c0_2] : memref<8x40xf32, #tpu.memory_space<vmem>>, vector<8x40xf32>
    %cst = arith.constant dense<0.000000e+00> : vector<8x128xf32>
    %12 = tpu.matmul %11, %10, %cst {dimension_numbers = #tpu.dot_dimension_numbers<[1], [0], [0], [1], [0, 0, 1, 1], [], []>} : vector<8x40xf32>, vector<40x128xf32>, vector<8x128xf32> -> vector<8x128xf32>
    %c0_3 = arith.constant 0 : index
    %c0_4 = arith.constant 0 : index
    %13 = vector.load %arg4[%c0_3, %c0_4] : memref<8x1xf32, #tpu.memory_space<vmem>>, vector<8x1xf32>
    %14 = vector.broadcast %13 : vector<8x1xf32> to vector<8x128xf32>
    %15 = arith.addf %12, %14 : vector<8x128xf32>
    %cst_5 = arith.constant 0.000000e+00 : f32
    %16 = vector.broadcast %cst_5 : f32 to vector<8x128xf32>
    %17 = arith.maximumf %15, %16 : vector<8x128xf32>
    %c0_6 = arith.constant 0 : index
    %c0_7 = arith.constant 0 : index
    %c0_8 = arith.constant 0 : index
    %18 = vector.load %arg5[%c0_6, %c0_7, %c0_8] : memref<1x8x128xf32, #tpu.memory_space<vmem>>, vector<1x8x128xf32>
    %19 = vector.shape_cast %18 : vector<1x8x128xf32> to vector<8x128xf32>
    %20 = vector.shape_cast %17 : vector<8x128xf32> to vector<1x8x128xf32>
    tpu.vector_store %arg5[%c0_6, %c0_7, %c0_8], %20 {strides = array<i32>} : memref<1x8x128xf32, #tpu.memory_space<vmem>>, vector<1x8x128xf32>,
    return
  }
  func.func @transform_0(%arg0: i32, %arg1: i32) -> (i32, i32, i32) {
    %c0_i32 = arith.constant 0 : i32
    %c0_i32_0 = arith.constant 0 : i32
    %c0_i32_1 = arith.constant 0 : i32
    return %arg0, %c0_i32, %c0_i32_0 : i32, i32, i32
  }
  func.func @transform_1(%arg0: i32, %arg1: i32) -> (i32, i32) {
    %c0_i32 = arith.constant 0 : i32
    %c0_i32_0 = arith.constant 0 : i32
    %c0_i32_1 = arith.constant 0 : i32
    return %c0_i32, %c0_i32_0 : i32, i32
  }
  func.func @transform_2(%arg0: i32, %arg1: i32) -> (i32, i32) {
    %c0_i32 = arith.constant 0 : i32
    %c0_i32_0 = arith.constant 0 : i32
    %c0_i32_1 = arith.constant 0 : i32
    return %c0_i32, %c0_i32_0 : i32, i32
  }
  func.func @transform_3(%arg0: i32, %arg1: i32) -> (i32, i32, i32) {
    %c0_i32 = arith.constant 0 : i32
    %c0_i32_0 = arith.constant 0 : i32
    return %arg0, %c0_i32, %arg1 : i32, i32, i32
  }
}

</mosaic_0001>

<llo_original>
// kernel: _conv_block_forward.1
$region0: #{_conv_block_forward.1}
  #allocation0 [shape = 'u32[]', space=smem, size = 0x4, offset = 0x4, fixed_abs, tag = 'smem constant byte address 0x4 - core index']
  #allocation1 [shape = 'u32[72,128]{1,0:T(1,128)}', space=vmem, size = 0x9000, scoped, tag = 'internal scratch']
  %s0 = inlined_call_operand.vmem [shape: f32[2,8,256], index: 0, kind: input, shape index: {}]
  %s1 = inlined_call_operand.vmem [shape: f32[8,40], index: 1, kind: input, shape index: {}]
  %s2 = inlined_call_operand.vmem [shape: f32[8,1], index: 2, kind: input, shape index: {}]
  %s3 = inlined_call_operand.hbm [shape: f32[2,8,128], index: 3, kind: output, shape index: {}]
  %s4 = sld [smem:[#allocation0]]
  $region45: #{_conv_block_forward.1} parent=0
    _
  %s6 = ssub.s32 1, %s4
  %s7 = scalar_select 0, %s6, %s4
  $region1: #{_conv_block_forward.1} parent=0
    #allocation2 [shape = 'u8[8192]{0}', space=vmem, size = 0x2000, scoped, tag = 'output window, operand 0']
    #allocation3 [shape = 's32[2]{0}', space=sflag, size = 0x8, scoped, tag = 'scoped memory for _conv_block_forward.1']
    %8 = vsyncpa [#allocation3], 0
    %s9 = scalar_lea.sflag [#allocation3], 1
    %10 = vsyncpa %s9, 0
    loop: start=0, step=1, limit=4
    $region2: #{_conv_block_forward.1} parent=1 // loop_pre_header
      _
    $region3: #{_conv_block_forward.1} parent=1 // loop_header
      %s12 = sphi 0, %s16
      %p13 = scmp.ge.s32.totalorder %s12, 4
      %s19 = sphi 0, %s31
      %s20 = sphi 0, %s27
      %s21 = sphi 0, %s19
      %s22 = sphi 0, %s20
      %s23 = sphi 0, %s21
      %s24 = sphi 0, %s22
      %s34 = sphi 0, %s36
      %s37 = sphi 0, %s34
      %s38 = sphi 0, %s37
      %s54 = sphi 0, %s38
      %s58 = sphi 0, %s58
      %s60 = sphi 0, %s58
      %s61 = sphi 0, %s60
      %s75 = sphi 0, %s61
      %s79 = sphi 0, %s79
      %s81 = sphi 0, %s79
      %s82 = sphi 0, %s81
      %s96 = sphi 0, %s82
      %s104 = sphi 0, %s106
      %s107 = sphi 0, %s104
      %s108 = sphi 0, %s107
      %s124 = sphi 0, %s108
    $region4: #{_conv_block_forward.1} parent=1 // loop_header_branch
      %15 = sbr.rel (%p13) target = $region8
    $region5: #{_conv_block_forward.1} parent=1 // loop_body
      %s17 = ssub.s32 %s12, 1
      %s18 = ssub.s32 %s12, 2
      %s25 = sadd.s32 1, %s20
      %p26 = scmp.ge.s32.totalorder %s25, 1
      %s27 = scalar_select %p26, 0, %s25
      %s28 = sadd.s32 1, %s19
      %s29 = scalar_select %p26, %s28, %s19
      %p30 = scmp.ge.s32.totalorder %s29, 2
      %s31 = scalar_select %p30, 0, %s29
      %s32 = ssub.s32 %s19, %s31
      %p33 = scmp.eq.s32.totalorder %s32, 0
      %s35 = sadd.s32 %s34, 1
      %s36 = scalar_select %p33, %s34, %s35
      %p39 = pneg %p33
      %p40 = scmp.eq.s32.totalorder %s12, 1
      %p41 = por %p39, %p40
      %p42 = scmp.ne.s32.totalorder %s34, %s37
      %p43 = scmp.eq.s32.totalorder %s12, 0
      %p44 = por %p42, %p43
      %p45 = scmp.ne.s32.totalorder %s34, %s37
      %p46 = scmp.eq.s32.totalorder %s17, 1
      %p47 = por %p45, %p46
      %p48 = scmp.ne.s32.totalorder %s37, %s38
      %p49 = scmp.eq.s32.totalorder %s17, 0
      %p50 = por %p48, %p49
      %p51 = scmp.ne.s32.totalorder %s37, %s38
      %p52 = scmp.eq.s32.totalorder %s18, 1
      %p53 = por %p51, %p52
      %p55 = scmp.ne.s32.totalorder %s38, %s54
      %p56 = scmp.eq.s32.totalorder %s18, 0
      %p57 = por %p55, %p56
      %s59 = sadd.s32 %s58, 1
      %p62 = scmp.eq.s32.totalorder %s12, 1
      %p63 = scmp.ne.s32.totalorder %s58, %s60
      %p64 = scmp.eq.s32.totalorder %s12, 0
      %p65 = por %p63, %p64
      %p66 = scmp.ne.s32.totalorder %s58, %s60
      %p67 = scmp.eq.s32.totalorder %s17, 1
      %p68 = por %p66, %p67
      %p69 = scmp.ne.s32.totalorder %s60, %s61
      %p70 = scmp.eq.s32.totalorder %s17, 0
      %p71 = por %p69, %p70
      %p72 = scmp.ne.s32.totalorder %s60, %s61
      %p73 = scmp.eq.s32.totalorder %s18, 1
      %p74 = por %p72, %p73
      %p76 = scmp.ne.s32.totalorder %s61, %s75
      %p77 = scmp.eq.s32.totalorder %s18, 0
      %p78 = por %p76, %p77
      %s80 = sadd.s32 %s79, 1
      %p83 = scmp.eq.s32.totalorder %s12, 1
      %p84 = scmp.ne.s32.totalorder %s79, %s81
      %p85 = scmp.eq.s32.totalorder %s12, 0
      %p86 = por %p84, %p85
      %p87 = scmp.ne.s32.totalorder %s79, %s81
      %p88 = scmp.eq.s32.totalorder %s17, 1
      %p89 = por %p87, %p88
      %p90 = scmp.ne.s32.totalorder %s81, %s82
      %p91 = scmp.eq.s32.totalorder %s17, 0
      %p92 = por %p90, %p91
      %p93 = scmp.ne.s32.totalorder %s81, %s82
      %p94 = scmp.eq.s32.totalorder %s18, 1
      %p95 = por %p93, %p94
      %p97 = scmp.ne.s32.totalorder %s82, %s96
      %p98 = scmp.eq.s32.totalorder %s18, 0
      %p99 = por %p97, %p98
      %s100 = ssub.s32 %s19, %s31
      %s101 = ssub.s32 %s20, %s27
      %s102 = sor.u32 %s100, %s101
      %p103 = scmp.eq.s32.totalorder %s102, 0
      %s105 = sadd.s32 %s104, 1
      %s106 = scalar_select %p103, %s104, %s105
      %p109 = pneg %p103
      %p110 = scmp.eq.s32.totalorder %s12, 1
      %p111 = por %p109, %p110
      %p112 = scmp.ne.s32.totalorder %s104, %s107
      %p113 = scmp.eq.s32.totalorder %s12, 0
      %p114 = por %p112, %p113
      %p115 = scmp.ne.s32.totalorder %s104, %s107
      %p116 = scmp.eq.s32.totalorder %s17, 1
      %p117 = por %p115, %p116
      %p118 = scmp.ne.s32.totalorder %s107, %s108
      %p119 = scmp.eq.s32.totalorder %s17, 0
      %p120 = por %p118, %p119
      %p121 = scmp.ne.s32.totalorder %s107, %s108
      %p122 = scmp.eq.s32.totalorder %s18, 1
      %p123 = por %p121, %p122
      %p125 = scmp.ne.s32.totalorder %s108, %s124
      %p126 = scmp.eq.s32.totalorder %s18, 0
      %p127 = por %p125, %p126
      %p128 = scmp.le.s32.totalorder 1, %s12
      %p129 = scmp.lt.s32.totalorder %s12, 3
      %p130 = pnand %p128, %p129
      %p131 = pneg %p130
      // Predicated region
      $region9: #{_conv_block_forward.1} parent=5 // pred_check
        _
      $region10: #{_conv_block_forward.1} parent=5 // pred_check_branch
        %133 = sbr.rel (%p130) target = $region12
      $region11: #{_conv_block_forward.1} parent=5 // pred_region
        %s134 = ssub.s32 %s12, 1
        // Predicated region
        $region13: #{_conv_block_forward.1} parent=11 // pred_check
          %p135 = pneg %p71
        $region14: #{_conv_block_forward.1} parent=11 // pred_check_branch
          %137 = sbr.rel (%p135) target = $region16
        $region15: #{_conv_block_forward.1} parent=11 // pred_region
          _
        $region16: #{_conv_block_forward.1} parent=11 // pred_fallthru
          _
        // Predicated region
        $region17: #{_conv_block_forward.1} parent=11 // pred_check
          %p138 = pneg %p92
        $region18: #{_conv_block_forward.1} parent=11 // pred_check_branch
          %140 = sbr.rel (%p138) target = $region20
        $region19: #{_conv_block_forward.1} parent=11 // pred_region
          _
        $region20: #{_conv_block_forward.1} parent=11 // pred_fallthru
          _
      $region12: #{_conv_block_forward.1} parent=5 // pred_fallthru
        _
      %p141 = scmp.lt.s32.totalorder %s12, 2
      // Predicated region
      $region21: #{_conv_block_forward.1} parent=5 // pred_check
        %p142 = pneg %p141
      $region22: #{_conv_block_forward.1} parent=5 // pred_check_branch
        %144 = sbr.rel (%p142) target = $region24
      $region23: #{_conv_block_forward.1} parent=5 // pred_region
        // Predicated region
        $region25: #{_conv_block_forward.1} parent=23 // pred_check
          %p145 = pneg %p44
        $region26: #{_conv_block_forward.1} parent=23 // pred_check_branch
          %147 = sbr.rel (%p145) target = $region28
        $region27: #{_conv_block_forward.1} parent=23 // pred_region
          %p148 = scmp.lt.s32.totalorder %s19, 1
          %s149 = scalar_select %p148, %s19, 1
          %s150 = smul.addr %s149, 2
          %s151 = smul.addr %s150, 8
          %s152 = scalar_lea.vmem %s0, %s151
        $region28: #{_conv_block_forward.1} parent=23 // pred_fallthru
          _
      $region24: #{_conv_block_forward.1} parent=5 // pred_fallthru
        _
      %p153 = scmp.le.s32.totalorder 1, %s12
      %p154 = scmp.lt.s32.totalorder %s12, 3
      %p155 = pnand %p153, %p154
      %p156 = pneg %p155
      // Predicated region
      $region29: #{_conv_block_forward.1} parent=5 // pred_check
        _
      $region30: #{_conv_block_forward.1} parent=5 // pred_check_branch
        %158 = sbr.rel (%p155) target = $region32
      $region31: #{_conv_block_forward.1} parent=5 // pred_region
        %s159 = ssub.s32 %s12, 1
        %p160 = scmp.lt.s32.totalorder %s21, 1
        %s161 = scalar_select %p160, %s21, 1
        %s162 = smul.addr %s161, 2
        %s163 = smul.addr %s162, 8
        %s164 = scalar_lea.vmem %s0, %s163
        %p165 = pneg %p50
        %p166 = pneg %p47
        %p167 = pneg %p71
        %p168 = pneg %p68
        %p169 = pneg %p92
        %p170 = pneg %p89
        %p171 = pneg %p120
        %p172 = pneg %p117
        %s173 = sand.u32 %s107, 1
        %s174 = scalar_lea.sflag [#allocation3], %s173
        %s175 = sand.u32 %s107, 1
        %s176 = smul.addr %s175, 8
        %s177 = scalar_lea.vmem [#allocation2], %s176
        %p178 = scmp.lt.s32.totalorder %s21, 1
        %s179 = scalar_select %p178, %s21, 1
        %s180 = smul.addr %s179, 2
        %s181 = smul.addr %s180, 8
        %s182 = scalar_lea.vmem %s0, %s181
        %s183 = smul.u32 %s22, 128
        %s184 = sshra.s32 %s183, 7
        %s185 = sand.u32 %s183, 127
        %s186 = smul.addr %s184, 8
        %s187 = scalar_lea.vmem %s182, %s186
        %v188 = vld [vmem:[%s187] sm:$0xff]
        %v189 = vld [vmem:[%s187 + $0x8] sm:$0xff]
        %192 = vrot.lane.b32.xlu0 %v188, 127
        %v193 = vpop.permute.xlu0 %192
        %194 = vrot.lane.b32.xlu0 %v189, 127
        %v195 = vpop.permute.xlu0 %194
        %vm196 = vcmask 1039360
        %v197 = vsel %vm196, %v193, %v195
        %199 = vrot.lane.b32.xlu0 %v188, 126
        %v200 = vpop.permute.xlu0 %199
        %201 = vrot.lane.b32.xlu0 %v189, 126
        %v202 = vpop.permute.xlu0 %201
        %vm203 = vcmask 1031168
        %v204 = vsel %vm203, %v200, %v202
        %206 = vrot.lane.b32.xlu0 %v188, 125
        %v207 = vpop.permute.xlu0 %206
        %208 = vrot.lane.b32.xlu0 %v189, 125
        %v209 = vpop.permute.xlu0 %208
        %vm210 = vcmask 1022976
        %v211 = vsel %vm210, %v207, %v209
        %213 = vrot.lane.b32.xlu0 %v188, 124
        %v214 = vpop.permute.xlu0 %213
        %215 = vrot.lane.b32.xlu0 %v189, 124
        %v216 = vpop.permute.xlu0 %215
        %vm217 = vcmask 1014784
        %v218 = vsel %vm217, %v214, %v216
        %v220 = vld [vmem:[%s1] sm:$0xff]
        %v221 = vld [vmem:[%s2] sm:$0xff]
        %223 = vset.pattern.permute.xlu0 0
        %224 = vperm.xlu0 %223, %v221
        %v225 = vpop.permute.xlu0 %224
        %vm227 = vcmask 326656
        %v229 = vsel %vm227, %v220, 0
        %231 = vmatpush.msra.mxu0 0.0
        %232 = vmatpush.msra.mxu0 0.0
        %233 = vmatpush.msra.mxu0 0.0
        %234 = vmatpush.msra.mxu0 0.0
        %235 = vmatpush.msra.mxu0 0.0
        %236 = vmatpush.msra.mxu0 0.0
        %237 = vmatpush.msra.mxu0 0.0
        %238 = vmatpush.msra.mxu0 0.0
        %239 = vmatpush.msra.mxu0 0.0
        %240 = vmatpush.msra.mxu0 0.0
        %241 = vmatpush.msra.mxu0 0.0
        %242 = vmatpush.msra.mxu0 %v218
        %243 = vmatpush.msra.mxu0 %v211
        %244 = vmatpush.msra.mxu0 %v204
        %245 = vmatpush.msra.mxu0 %v197
        %246 = vmatpush.msra.mxu0 %v188
        %247 = vmatmul.f32.gmra.mxu0 %v229
        %v248 = vpop.f32.mrf.mxu0
        %v249 = vadd.f32 %v225, %v248
        %250 = vdwg.mxu0
        %v251 = vmax.f32 %v249, 0.0
        %252 = vst [vmem:[%s177] sm:$0xff] %v251
        %s253 = sand.u32 %s107, 1
        %s254 = scalar_lea.sflag [#allocation3], %s253
        %s255 = sand.u32 %s107, 1
        %s256 = smul.addr %s255, 8
        %s257 = scalar_lea.vmem [#allocation2], %s256
        // Predicated region
        $region33: #{_conv_block_forward.1} parent=31 // pred_check
          %p258 = pneg %p117
        $region34: #{_conv_block_forward.1} parent=31 // pred_check_branch
          %260 = sbr.rel (%p258) target = $region36
        $region35: #{_conv_block_forward.1} parent=31 // pred_region
          %262 = vsyncadd %s254, 0
          %s263 = sadd.s32 %s22, %s21
          %s264 = smul.addr %s263, 8
          %s265 = scalar_lea.hbm %s3, %s264
          %s267 = sshll.u32 %s257, 4
          %s268 = int_to_ptr.vmem [resolvable:$true] %s267
          %s269 = sshll.u32 %s265, 4
          %s270 = int_to_ptr.hbm [resolvable:$true] %s269
          %272 = dma.vmem_to_hbm [thread:$0]  %s268, 128, %s270, %s254
        $region36: #{_conv_block_forward.1} parent=31 // pred_fallthru
          _
      $region32: #{_conv_block_forward.1} parent=5 // pred_fallthru
        _
      %p273 = scmp.le.s32.totalorder 2, %s12
      // Predicated region
      $region37: #{_conv_block_forward.1} parent=5 // pred_check
        %p274 = pneg %p273
      $region38: #{_conv_block_forward.1} parent=5 // pred_check_branch
        %276 = sbr.rel (%p274) target = $region40
      $region39: #{_conv_block_forward.1} parent=5 // pred_region
        %s277 = ssub.s32 %s12, 2
        // Predicated region
        $region41: #{_conv_block_forward.1} parent=39 // pred_check
          %p278 = pneg %p123
        $region42: #{_conv_block_forward.1} parent=39 // pred_check_branch
          %280 = sbr.rel (%p278) target = $region44
        $region43: #{_conv_block_forward.1} parent=39 // pred_region
          %s281 = sand.u32 %s108, 1
          %s282 = scalar_lea.sflag [#allocation3], %s281
          %s283 = sand.u32 %s108, 1
          %s284 = smul.addr %s283, 8
          %s285 = scalar_lea.vmem [#allocation2], %s284
          %287 = dma.done %s282, 128
        $region44: #{_conv_block_forward.1} parent=39 // pred_fallthru
          _
      $region40: #{_conv_block_forward.1} parent=5 // pred_fallthru
        _
    $region6: #{_conv_block_forward.1} parent=1 // loop_footer
      %s16 = sadd.s32 1, %s12
    $region7: #{_conv_block_forward.1} parent=1 // loop_footer_branch
      %11 = sbr.rel target = $region3
    $region8: #{_conv_block_forward.1} parent=1 // loop_exit
      _
    %288 = vsyncpa [#allocation3], 1
    %s289 = scalar_lea.sflag [#allocation3], 1
    %290 = vsyncpa %s289, 1

</llo_original>
